<compile_context>
chip_gen: v7x
topology: tpu7x:2x2x1
jax: 0.10.0
libtpu: 0.0.40
codegen_flags: <defaults>
</compile_context>

<pallas_src>
import jax
import jax.numpy as jnp
from jax.experimental import pallas as pl
from jax.experimental.pallas import tpu as pltpu

BN_EPS = 1e-5
LEAKY_SLOPE = 0.1

_MIB = 1024 * 1024
_TILE_BUDGET_BYTES = 24 * _MIB   # conservative: double-buffered blocks + body fit v7x (64 MiB VMEM)


def _bn_lrelu_linear_kernel(x_ref, scale_ref, shift_ref, wt_ref, o_ref):
    # x arrives bf16 (halved HBM read); upcast to f32 for the affine BN math.
    x = x_ref[...].astype(jnp.float32)            # (TILE_N, Cin)
    y = x * scale_ref[...] + shift_ref[...]       # folded inference BatchNorm1d
    y = jnp.maximum(y, LEAKY_SLOPE * y)           # LeakyReLU(0.1): single VALU max
    # Dropout(p=0.0) -> identity
    out = jnp.dot(y.astype(jnp.bfloat16), wt_ref[...],
                  preferred_element_type=jnp.float32)   # MXU, f32 accumulate
    o_ref[...] = out.astype(o_ref.dtype)          # bf16 store (halved writeback)


def prepare_params(gamma, beta, running_mean, running_var, weight):
    """One-time parameter preparation (call once, NOT per forward).

    Returns (scale, shift, w_t):
      scale, shift : (1, Cin) f32, folded inference BatchNorm
      w_t          : (Cin, Cout_pad) bf16, transposed weight zero-padded so
                     Cout_pad is a multiple of 128 (lane-dense output tiles).
    """
    cout, cin = weight.shape
    scale = gamma * jax.lax.rsqrt(running_var + BN_EPS)          # (Cin,)
    shift = beta - running_mean * scale                          # (Cin,)

    cout_pad = ((cout + 127) // 128) * 128
    w_t = jnp.zeros((cin, cout_pad), dtype=jnp.bfloat16)
    w_t = w_t.at[:, :cout].set(weight.T.astype(jnp.bfloat16))

    return (scale.reshape(1, cin).astype(jnp.float32),
            shift.reshape(1, cin).astype(jnp.float32),
            w_t)


def _round8(v):
    return max(8, (v // 8) * 8)


def _footprint_bytes(tile_n, tile_cout, cin):
    xb = 2 * tile_n * cin * 2              # bf16 x block, double-buffered
    pb = 2 * 2 * cin * 4                   # scale + shift (f32), double-buffered
    wb = 2 * cin * tile_cout * 2           # bf16 W^T block, double-buffered
    ob = 2 * tile_n * tile_cout * 2        # bf16 out block, double-buffered
    body = tile_n * cin * (4 + 2) + tile_n * tile_cout * 4   # y_f32, y_bf16, f32 acc
    return xb + pb + wb + ob + body


def _select_tiles(n, cin, cout_pad):
    tile_n = n if n <= 512 else 512
    if tile_n < n:
        tile_n = _round8(tile_n)
    tile_cout = cout_pad                   # keep the weight VMEM-resident when it fits
    while _footprint_bytes(tile_n, tile_cout, cin) > _TILE_BUDGET_BYTES:
        if tile_n > 256:
            tile_n = _round8(tile_n // 2)
        elif tile_cout > 512:
            tile_cout = max(128, (tile_cout // 2 // 128) * 128)
        elif tile_n > 64:
            tile_n = _round8(tile_n // 2)
        elif tile_cout > 128:
            tile_cout = max(128, (tile_cout // 2 // 128) * 128)
        elif tile_n > 8:
            tile_n = _round8(tile_n // 2)
        else:
            break                          # smallest legal tiles
    # v7x megacore: guarantee >= 2 grid blocks when the problem allows it.
    if pl.cdiv(n, tile_n) * pl.cdiv(cout_pad, tile_cout) == 1:
        if tile_n >= 16:
            tile_n = _round8(tile_n // 2)
        elif tile_cout >= 256:
            tile_cout //= 2
    return tile_n, tile_cout


def linear_module_forward(x, scale, shift, w_t):
    """Fused BN(inference) -> LeakyReLU(0.1) -> Dropout(0.0) -> Linear(bias=False).

    x     : (N, Cin)  bf16 activations (kept bf16 at the HBM boundary)
    scale : (1, Cin)  f32 folded-BN scale
    shift : (1, Cin)  f32 folded-BN shift
    w_t   : (Cin, Cout_pad) bf16, Cout_pad a multiple of 128

    Returns the *padded* (N, Cout_pad) bf16 output; columns >= out_channels are
    exactly zero.  Keep the padded layout flowing downstream, or slice lazily
    inside the consumer -- do NOT materialize a standalone slice copy.
    """
    n, cin = x.shape
    cin_w, cout_pad = w_t.shape
    assert cin_w == cin

    tile_n, tile_cout = _select_tiles(n, cin, cout_pad)
    n_i = pl.cdiv(n, tile_n)
    n_j = pl.cdiv(cout_pad, tile_cout)

    x_bytes = n * cin * 2
    w_bytes = cin * cout_pad * 2
    # Re-streamed bytes for each grid order; pick the cheaper one.
    restream_w = (n_i - 1) * w_bytes if n_j > 1 else 0   # order (i, j): W re-streams
    restream_x = (n_j - 1) * x_bytes if n_i > 1 else 0   # order (j, i): x re-streams
    rows_outer = restream_w <= restream_x

    if rows_outer:
        grid = (n_i, n_j)
        x_map = lambda i, j: (i, 0)
        w_map = lambda i, j: (0, j)
        o_map = lambda i, j: (i, j)
        extra_bytes = restream_w
    else:
        grid = (n_j, n_i)
        x_map = lambda j, i: (i, 0)
        w_map = lambda j, i: (0, j)
        o_map = lambda j, i: (i, j)
        extra_bytes = restream_x

    param_map = lambda a, b: (0, 0)

    footprint = _footprint_bytes(tile_n, tile_cout, cin)
    vmem_limit = int(min(40 * _MIB, max(16 * _MIB, footprint + 8 * _MIB)))

    return pl.pallas_call(
        _bn_lrelu_linear_kernel,
        out_shape=jax.ShapeDtypeStruct((n, cout_pad), jnp.bfloat16),
        grid=grid,
        in_specs=[
            pl.BlockSpec((tile_n, cin), x_map),         # x rows (bf16)
            pl.BlockSpec((1, cin), param_map),          # folded-BN scale
            pl.BlockSpec((1, cin), param_map),          # folded-BN shift
            pl.BlockSpec((cin, tile_cout), w_map),      # W^T (bf16, padded)
        ],
        out_specs=pl.BlockSpec((tile_n, tile_cout), o_map),
        compiler_params=pltpu.CompilerParams(
            dimension_semantics=("parallel", "parallel"),
            vmem_limit_bytes=vmem_limit),
        cost_estimate=pl.CostEstimate(
            flops=2 * n * cin * cout_pad,
            transcendentals=0,
            bytes_accessed=(x_bytes + w_bytes + extra_bytes
                            + n * cout_pad * 2          # bf16 output
                            + 2 * cin * 4)),            # scale + shift
    )(x, scale, shift, w_t)


def reference_forward(x, gamma, beta, running_mean, running_var, weight):
    inv_std = 1.0 / jnp.sqrt(running_var + BN_EPS)
    y = (x - running_mean[None, :]) * inv_std[None, :] * gamma[None, :] + beta[None, :]
    y = jnp.where(y >= 0.0, y, LEAKY_SLOPE * y)
    return y @ weight.T


if __name__ == "__main__":
    in_channels, out_channels = 32, 64
    batch = 8

    key = jax.random.PRNGKey(0)
    kx, kw, kg, kb, km, kv = jax.random.split(key, 6)

    x_f32 = jax.random.normal(kx, (batch, in_channels), dtype=jnp.float32)
    x = x_f32.astype(jnp.bfloat16)   # activations live in bf16 at the HBM boundary

    # Deterministic synthetic parameters (shapes follow the PyTorch module).
    weight = jax.random.normal(kw, (out_channels, in_channels),
                               dtype=jnp.float32) * (1.0 / in_channels ** 0.5)
    gamma = 1.0 + 0.1 * jax.random.normal(kg, (in_channels,), dtype=jnp.float32)
    beta = 0.1 * jax.random.normal(kb, (in_channels,), dtype=jnp.float32)
    running_mean = 0.1 * jax.random.normal(km, (in_channels,), dtype=jnp.float32)
    running_var = jnp.abs(1.0 + 0.1 * jax.random.normal(
        kv, (in_channels,), dtype=jnp.float32))

    # One-time parameter prep (fold BN, transpose + bf16-cast + pad weight).
    scale, shift, w_t = prepare_params(gamma, beta, running_mean, running_var,
                                       weight)

    out_pad = linear_module_forward(x, scale, shift, w_t)
    out_pad = jax.block_until_ready(out_pad)

    # Lazy consumer-side slice: demo correctness check only -- production keeps
    # the padded layout or fuses the slice into the next op.
    out = out_pad[:, :out_channels].astype(jnp.float32)

    ref = reference_forward(x.astype(jnp.float32), gamma, beta, running_mean,
                            running_var, weight)
    cout_pad = ((out_channels + 127) // 128) * 128
    assert out_pad.shape == (batch, cout_pad)
    assert out_pad.dtype == jnp.bfloat16
    # bf16 activations/weights/output (f32 MXU accumulation) -> relaxed tolerance.
    assert jnp.allclose(out, ref, atol=6e-2, rtol=6e-2), "mismatch vs reference"
    # Padded columns must be exactly zero (zero weight-pad columns).
    assert jnp.all(out_pad[:, out_channels:] == 0)

    print("KERNEL_OK")
</pallas_src>

<mosaic_0001>
module attributes {stable_mosaic.version = 11 : i64} {
  func.func @_bn_lrelu_linear_kernel(%arg0: i32, %arg1: i32, %arg2: memref<8x32xbf16, #tpu.memory_space<vmem>>, %arg3: memref<1x32xf32, #tpu.memory_space<vmem>>, %arg4: memref<1x32xf32, #tpu.memory_space<vmem>>, %arg5: memref<32x128xbf16, #tpu.memory_space<vmem>>, %arg6: memref<8x128xbf16, #tpu.memory_space<vmem>>) attributes {dimension_semantics = [#tpu.dimension_semantics<parallel>, #tpu.dimension_semantics<parallel>], iteration_bounds = array<i64: 1, 1>, scalar_prefetch = 0 : i64, scratch_operands = 0 : i64, tpu.core_type = #tpu.core_type<tc>, window_params = [{transform_indices = @transform_0, window_bounds = array<i64: 8, 32>}, {pipeline_mode = #tpu.pipeline_mode<synchronous>, transform_indices = @transform_1, window_bounds = array<i64: 1, 32>}, {pipeline_mode = #tpu.pipeline_mode<synchronous>, transform_indices = @transform_2, window_bounds = array<i64: 1, 32>}, {transform_indices = @transform_3, window_bounds = array<i64: 32, 128>}, {transform_indices = @transform_4, window_bounds = array<i64: 8, 128>}]} {
    %c0 = arith.constant 0 : index
    %c0_0 = arith.constant 0 : index
    %0 = vector.load %arg2[%c0, %c0_0] : memref<8x32xbf16, #tpu.memory_space<vmem>>, vector<8x32xbf16>
    %1 = arith.extf %0 : vector<8x32xbf16> to vector<8x32xf32>
    %c0_1 = arith.constant 0 : index
    %c0_2 = arith.constant 0 : index
    %2 = vector.load %arg3[%c0_1, %c0_2] : memref<1x32xf32, #tpu.memory_space<vmem>>, vector<1x32xf32>
    %3 = vector.broadcast %2 : vector<1x32xf32> to vector<8x32xf32>
    %4 = arith.mulf %1, %3 : vector<8x32xf32>
    %c0_3 = arith.constant 0 : index
    %c0_4 = arith.constant 0 : index
    %5 = vector.load %arg4[%c0_3, %c0_4] : memref<1x32xf32, #tpu.memory_space<vmem>>, vector<1x32xf32>
    %6 = vector.broadcast %5 : vector<1x32xf32> to vector<8x32xf32>
    %7 = arith.addf %4, %6 : vector<8x32xf32>
    %cst = arith.constant 1.000000e-01 : f32
    %8 = vector.broadcast %cst : f32 to vector<8x32xf32>
    %9 = arith.mulf %8, %7 : vector<8x32xf32>
    %10 = arith.maximumf %7, %9 : vector<8x32xf32>
    %11 = arith.truncf %10 : vector<8x32xf32> to vector<8x32xbf16>
    %c0_5 = arith.constant 0 : index
    %c0_6 = arith.constant 0 : index
    %12 = vector.load %arg5[%c0_5, %c0_6] : memref<32x128xbf16, #tpu.memory_space<vmem>>, vector<32x128xbf16>
    %cst_7 = arith.constant dense<0.000000e+00> : vector<8x128xf32>
    %13 = tpu.matmul %11, %12, %cst_7 {dimension_numbers = #tpu.dot_dimension_numbers<[1], [0], [0], [1], [0, 0, 1, 1], [], []>} : vector<8x32xbf16>, vector<32x128xbf16>, vector<8x128xf32> -> vector<8x128xf32>
    %14 = arith.truncf %13 : vector<8x128xf32> to vector<8x128xbf16>
    %c0_8 = arith.constant 0 : index
    %c0_9 = arith.constant 0 : index
    %15 = vector.load %arg6[%c0_8, %c0_9] : memref<8x128xbf16, #tpu.memory_space<vmem>>, vector<8x128xbf16>
    tpu.vector_store %arg6[%c0_8, %c0_9], %14 {strides = array<i32>} : memref<8x128xbf16, #tpu.memory_space<vmem>>, vector<8x128xbf16>,
    return
  }
  func.func @transform_0(%arg0: i32, %arg1: i32) -> (i32, i32) {
    %c0_i32 = arith.constant 0 : i32
    %c0_i32_0 = arith.constant 0 : i32
    return %arg0, %c0_i32 : i32, i32
  }
  func.func @transform_1(%arg0: i32, %arg1: i32) -> (i32, i32) {
    %c0_i32 = arith.constant 0 : i32
    %c0_i32_0 = arith.constant 0 : i32
    %c0_i32_1 = arith.constant 0 : i32
    return %c0_i32, %c0_i32_0 : i32, i32
  }
  func.func @transform_2(%arg0: i32, %arg1: i32) -> (i32, i32) {
    %c0_i32 = arith.constant 0 : i32
    %c0_i32_0 = arith.constant 0 : i32
    %c0_i32_1 = arith.constant 0 : i32
    return %c0_i32, %c0_i32_0 : i32, i32
  }
  func.func @transform_3(%arg0: i32, %arg1: i32) -> (i32, i32) {
    %c0_i32 = arith.constant 0 : i32
    %c0_i32_0 = arith.constant 0 : i32
    return %c0_i32, %arg1 : i32, i32
  }
  func.func @transform_4(%arg0: i32, %arg1: i32) -> (i32, i32) {
    %c0_i32 = arith.constant 0 : i32
    return %arg0, %arg1 : i32, i32
  }
}

</mosaic_0001>

<llo_original>
// kernel: tpu_custom_call.1
$region0: #{tpu_custom_call.1}
  #allocation0 [shape = 'u32[]', space=smem, size = 0x4, offset = 0x4, fixed_abs, tag = 'smem constant byte address 0x4 - core index']
  #allocation1 [shape = 'u32[144,128]{1,0:T(1,128)}', space=vmem, size = 0x12000, scoped, tag = 'internal scratch']
  %s0 = inlined_call_operand.hbm [shape: bf16[8,32], index: 0, kind: input, shape index: {}]
  %s1 = inlined_call_operand.vmem [shape: f32[1,32], index: 1, kind: input, shape index: {}]
  %s2 = inlined_call_operand.vmem [shape: f32[1,32], index: 2, kind: input, shape index: {}]
  %s3 = inlined_call_operand.hbm [shape: bf16[32,128], index: 3, kind: input, shape index: {}]
  %s4 = inlined_call_operand.hbm [shape: bf16[8,128], index: 4, kind: output, shape index: {}]
  %s5 = sld [smem:[#allocation0]]
  $region34: #{tpu_custom_call.1} parent=0
    _
  %s7 = ssub.s32 1, %s5
  %s8 = scalar_select 0, %s7, %s5
  $region1: #{tpu_custom_call.1} parent=0
    #allocation2 [shape = 'u8[2048]{0}', space=vmem, size = 0x800, scoped, tag = 'input window, operand 0, single buffered']
    #allocation3 [shape = 's32[1]{0}', space=sflag, size = 0x4, scoped, tag = 'scoped memory for tpu_custom_call.1']
    #allocation4 [shape = 's32[1]{0}', space=sflag, size = 0x4, scoped, tag = 'scoped memory for tpu_custom_call.1']
    #allocation5 [shape = 'u8[8192]{0}', space=vmem, size = 0x2000, scoped, tag = 'input window, operand 3, single buffered']
    #allocation6 [shape = 's32[1]{0}', space=sflag, size = 0x4, scoped, tag = 'scoped memory for tpu_custom_call.1']
    #allocation7 [shape = 'u8[2048]{0}', space=vmem, size = 0x800, scoped, tag = 'output window, operand 0, single buffered']
    %9 = vsyncpa [#allocation3], 0
    %10 = vsyncpa [#allocation6], 0
    %11 = vsyncpa [#allocation4], 0
    // Predicated region
    $region2: #{tpu_custom_call.1} parent=1 // pred_check
      _
    $region3: #{tpu_custom_call.1} parent=1 // pred_check_branch
      %13 = sbr.rel (0) target = $region5
    $region4: #{tpu_custom_call.1} parent=1 // pred_region
      %s15 = ssub.s32 64, 64
      %16 = vsyncadd [#allocation3], %s15
      %s18 = sshll.u32 [#allocation2], 4
      %s19 = int_to_ptr.vmem [resolvable:$true] %s18
      %21 = dma.hbm_to_vmem [thread:$0]  %s0, 64, %s19, [#allocation3]
    $region5: #{tpu_custom_call.1} parent=1 // pred_fallthru
      _
    // Predicated region
    $region6: #{tpu_custom_call.1} parent=1 // pred_check
      _
    $region7: #{tpu_custom_call.1} parent=1 // pred_check_branch
      %23 = sbr.rel (0) target = $region9
    $region8: #{tpu_custom_call.1} parent=1 // pred_region
      _
    $region9: #{tpu_custom_call.1} parent=1 // pred_fallthru
      _
    // Predicated region
    $region10: #{tpu_custom_call.1} parent=1 // pred_check
      _
    $region11: #{tpu_custom_call.1} parent=1 // pred_check_branch
      %25 = sbr.rel (0) target = $region13
    $region12: #{tpu_custom_call.1} parent=1 // pred_region
      _
    $region13: #{tpu_custom_call.1} parent=1 // pred_fallthru
      _
    // Predicated region
    $region14: #{tpu_custom_call.1} parent=1 // pred_check
      _
    $region15: #{tpu_custom_call.1} parent=1 // pred_check_branch
      %27 = sbr.rel (0) target = $region17
    $region16: #{tpu_custom_call.1} parent=1 // pred_region
      %s29 = ssub.s32 256, 256
      %30 = vsyncadd [#allocation6], %s29
      %s31 = sshll.u32 [#allocation5], 4
      %s32 = int_to_ptr.vmem [resolvable:$true] %s31
      %37 = dma.hbm_to_vmem [thread:$0]  %s3, 256, %s32, [#allocation6], 64, 64, 4
    $region17: #{tpu_custom_call.1} parent=1 // pred_fallthru
      _
    // Predicated region
    $region18: #{tpu_custom_call.1} parent=1 // pred_check
      _
    $region19: #{tpu_custom_call.1} parent=1 // pred_check_branch
      %39 = sbr.rel (0) target = $region21
    $region20: #{tpu_custom_call.1} parent=1 // pred_region
      %40 = dma.done [#allocation3], 64
    $region21: #{tpu_custom_call.1} parent=1 // pred_fallthru
      _
    // Predicated region
    $region22: #{tpu_custom_call.1} parent=1 // pred_check
      _
    $region23: #{tpu_custom_call.1} parent=1 // pred_check_branch
      %42 = sbr.rel (0) target = $region25
    $region24: #{tpu_custom_call.1} parent=1 // pred_region
      %43 = dma.done [#allocation6], 256
    $region25: #{tpu_custom_call.1} parent=1 // pred_fallthru
      _
    %v45 = vld [vmem:[#allocation2] sm:$0xf]
    %v46 = vunpack.c.l.bf16 %v45
    %v47 = vld [vmem:[%s1] sm:$0x1]
    %v49 = vlaneseq
    %v50 = vshrl.u32 %v49, 7
    %v51 = vsub.s32 0, %v50
    %v52 = vrot.slane %v47, %v51
    %v54 = vmul.f32 %v46, %v52
    %v55 = vld [vmem:[%s2] sm:$0x1]
    %v57 = vlaneseq
    %v58 = vshrl.u32 %v57, 7
    %v59 = vsub.s32 0, %v58
    %v60 = vrot.slane %v55, %v59
    %v62 = vadd.f32 %v54, %v60
    %v63 = vmul.f32 %v62, 0.1
    %v64 = vmax.f32 %v62, %v63
    %v65 = vpack.c.bf16 %v64, %v64
    %v66 = vld [vmem:[#allocation5] sm:$0xf]
    %v67 = vld [vmem:[#allocation5 + $0x4] sm:$0xf]
    %v68 = vld [vmem:[#allocation5 + $0x8] sm:$0xf]
    %v69 = vld [vmem:[#allocation5 + $0xc] sm:$0xf]
    %v74 = vunpack.c.l.b16 %v66
    %v75 = vunpack.c.l.b16 %v67
    %v76 = vunpack.c.l.b16 %v68
    %v77 = vunpack.c.l.b16 %v69
    %v78 = vpack.c.b16 %v75, %v74
    %v79 = vpack.c.b16 %v77, %v76
    %vm82 = vcmask 261120
    %v84 = vsel %vm82, %v65, 0
    %86 = vmatprep.subr.bf16.mxu0 0
    %87 = vmatpush1.bf16.msra.mxu0 %v78
    %88 = vmatprep.subr.bf16.mxu0 0
    %89 = vmatpush1.bf16.msra.mxu0 %v79
    %90 = vmatprep.subr.bf16.mxu0 0
    %91 = vmatpush1.bf16.msra.mxu0 0
    %92 = vmatprep.subr.bf16.mxu0 0
    %93 = vmatpush1.bf16.msra.mxu0 0
    %94 = vmatprep.subr.bf16.mxu0 0
    %95 = vmatpush1.bf16.msra.mxu0 0
    %96 = vmatprep.subr.bf16.mxu0 0
    %97 = vmatpush1.bf16.msra.mxu0 0
    %98 = vmatprep.subr.bf16.mxu0 0
    %99 = vmatpush1.bf16.msra.mxu0 0
    %100 = vmatprep.subr.bf16.mxu0 0
    %101 = vmatpush1.bf16.msra.mxu0 0
    %102 = vmatprep.subr.bf16.mxu0 0
    %103 = vmatpush1.bf16.msra.mxu0 0
    %104 = vmatprep.subr.bf16.mxu0 0
    %105 = vmatpush1.bf16.msra.mxu0 0
    %106 = vmatprep.subr.bf16.mxu0 0
    %107 = vmatpush1.bf16.msra.mxu0 0
    %108 = vmatprep.subr.bf16.mxu0 0
    %109 = vmatpush1.bf16.msra.mxu0 0
    %110 = vmatprep.subr.bf16.mxu0 0
    %111 = vmatpush1.bf16.msra.mxu0 0
    %112 = vmatprep.subr.bf16.mxu0 0
    %113 = vmatpush1.bf16.msra.mxu0 0
    %114 = vmatprep.subr.bf16.mxu0 0
    %115 = vmatpush1.bf16.msra.mxu0 0
    %116 = vmatprep.subr.bf16.mxu0 0
    %117 = vmatpush1.bf16.msra.mxu0 0
    %118 = vmatprep.mubr.bf16.mxu0 0
    %119 = vmatmul.mubr.bf16.gmra.mrb[0].mxu0 %v84
    %v120 = vpop.f32.mrb[0].mxu0
    %v121 = vadd.f32 0.0, %v120
    %v122 = vpop.f32.mrb[0].mxu0
    %v123 = vpop.f32.mrb[0].mxu0
    %v124 = vpop.f32.mrb[0].mxu0
    %125 = vdwg.mxu0
    %v126 = vpack.c.bf16 %v121, %v121
    %127 = vst [vmem:[#allocation7] sm:$0xf] %v126
    // Predicated region
    $region26: #{tpu_custom_call.1} parent=1 // pred_check
      _
    $region27: #{tpu_custom_call.1} parent=1 // pred_check_branch
      %129 = sbr.rel (0) target = $region29
    $region28: #{tpu_custom_call.1} parent=1 // pred_region
      %s131 = ssub.s32 64, 64
      %132 = vsyncadd [#allocation4], %s131
      %s134 = sshll.u32 [#allocation7], 4
      %s135 = int_to_ptr.vmem [resolvable:$true] %s134
      %137 = dma.vmem_to_hbm [thread:$0]  %s135, 64, %s4, [#allocation4]
    $region29: #{tpu_custom_call.1} parent=1 // pred_fallthru
      _
    // Predicated region
    $region30: #{tpu_custom_call.1} parent=1 // pred_check
      _
    $region31: #{tpu_custom_call.1} parent=1 // pred_check_branch
      %139 = sbr.rel (0) target = $region33
    $region32: #{tpu_custom_call.1} parent=1 // pred_region
      %140 = dma.done [#allocation4], 64
    $region33: #{tpu_custom_call.1} parent=1 // pred_fallthru
      _
    %141 = vsyncpa [#allocation3], 1
    %142 = vsyncpa [#allocation6], 1
    %143 = vsyncpa [#allocation4], 1

</llo_original>
